<compile_context>
chip_gen: v5e
topology: v5e:2x2
jax: 0.10.0
libtpu: 0.0.40
codegen_flags: <defaults>
</compile_context>

<pallas_src>
import math
import jax
import jax.numpy as jnp
from jax.experimental import pallas as pl
from jax.experimental.pallas import tpu as pltpu

IN_F = 256
HID_F = 64
OUT_F = 16
LN_EPS = 1e-5          # PyTorch nn.LayerNorm default
LEAKY_SLOPE = 0.2


# ---------------------------------------------------------------------------
# In-kernel helpers (all math in f32 on the VPU/EUP).
# ---------------------------------------------------------------------------
def _layer_norm(h, gamma, beta):
    mu = jnp.mean(h, axis=-1, keepdims=True)
    var = jnp.mean((h - mu) ** 2, axis=-1, keepdims=True)   # biased var (torch)
    return (h - mu) * jax.lax.rsqrt(var + LN_EPS) * gamma + beta


def _leaky_relu(h):
    return jnp.where(h > 0, h, LEAKY_SLOPE * h)


# ---------------------------------------------------------------------------
# Kernels
# ---------------------------------------------------------------------------
def _xw_kernel(x_ref, w_ref, o_ref):
    """Hoisted dense matmul: s1 = x2d @ W1, full-row-occupancy MXU tiles."""
    o_ref[...] = jnp.dot(
        x_ref[...], w_ref[...], preferred_element_type=jnp.float32
    ).astype(o_ref.dtype)


def _gc1_kernel(adj_ref, s1_ref, w2_ref, p1_ref, o_ref):
    """Row tile of layer 1: adj_tile @ s1 + b1 -> LN -> LeakyReLU -> @ W2."""
    h = jnp.dot(adj_ref[...], s1_ref[...], preferred_element_type=jnp.float32)
    h = h + p1_ref[0:1, :]                                    # bias b1
    h = _leaky_relu(_layer_norm(h, p1_ref[1:2, :], p1_ref[2:3, :]))
    s2 = jnp.dot(h.astype(w2_ref.dtype), w2_ref[...],
                 preferred_element_type=jnp.float32)
    o_ref[...] = s2.astype(o_ref.dtype)


def _gc2_kernel(adj_ref, s2_ref, p2_ref, o_ref):
    """Row tile of layer 2: adj_tile @ s2 + b2 -> LN -> LeakyReLU."""
    h = jnp.dot(adj_ref[...], s2_ref[...], preferred_element_type=jnp.float32)
    h = h + p2_ref[0:1, :]                                    # bias b2
    h = _leaky_relu(_layer_norm(h, p2_ref[1:2, :], p2_ref[2:3, :]))
    o_ref[...] = h.astype(o_ref.dtype)


# ---------------------------------------------------------------------------
# Tiling / VMEM helpers
# ---------------------------------------------------------------------------
def _pick_tile(n, max_tile=512):
    """Largest power-of-two row tile <= max_tile that divides n, else full n."""
    t = max_tile
    while t >= 8:
        if n % t == 0:
            return t
        t //= 2
    return n  # relies on the full-dim exemption to the (8,128) rule


def _vmem_limit(block_bytes):
    """2x (double-buffer) the per-step blocks + headroom, clamped to [16, 64] MiB."""
    need = 2 * int(block_bytes) + (8 << 20)
    return int(min(64 << 20, max(16 << 20, need)))


# ---------------------------------------------------------------------------
# Forward pass
# ---------------------------------------------------------------------------
def gcn_forward(x, adj, params, *, compute_dtype=jnp.bfloat16):
    """x: (B, N, IN_F) f32, adj: (B, N, N) f32. Returns (B, N, OUT_F) f32."""
    B, N, _ = x.shape
    w1, b1, g1, bt1, w2, b2, g2, bt2 = params
    cd = compute_dtype
    isz = jnp.dtype(cd).itemsize

    # Consolidated f32 LayerNorm/bias slabs: rows = (bias, gamma, beta).
    p1 = jnp.stack([b1, g1, bt1]).astype(jnp.float32)   # (3, HID_F)
    p2 = jnp.stack([b2, g2, bt2]).astype(jnp.float32)   # (3, OUT_F)

    w1c = w1.astype(cd)
    w2c = w2.astype(cd)
    adj_c = adj.astype(cd)
    x_c = x.astype(cd)

    # ---- Stage 0: hoisted s1 = x @ W1 over the flattened (B*N) row space ----
    M = B * N
    TM = _pick_tile(M)
    x2d = x_c.reshape(M, IN_F)
    vmem0 = _vmem_limit(TM * IN_F * isz + IN_F * HID_F * isz + TM * HID_F * isz)
    s1 = pl.pallas_call(
        _xw_kernel,
        out_shape=jax.ShapeDtypeStruct((M, HID_F), cd),
        grid_spec=pltpu.PrefetchScalarGridSpec(
            num_scalar_prefetch=0,
            grid=(M // TM,),
            in_specs=[
                pl.BlockSpec((TM, IN_F), lambda i: (i, 0)),
                pl.BlockSpec((IN_F, HID_F), lambda i: (0, 0)),
            ],
            out_specs=pl.BlockSpec((TM, HID_F), lambda i: (i, 0)),
        ),
        compiler_params=pltpu.CompilerParams(
            dimension_semantics=("parallel",),
            vmem_limit_bytes=vmem0),
    )(x2d, w1c)
    s1 = s1.reshape(B, N, HID_F)

    # ---- Row tiling of the adjacency for both layer passes ----
    TN = _pick_tile(N)
    R = N // TN

    # ---- Pass A: s2 = LeakyReLU(LN(adj @ s1 + b1)) @ W2, row-tiled ----
    vmem_a = _vmem_limit(TN * N * isz + N * HID_F * isz
                         + HID_F * OUT_F * isz + 3 * HID_F * 4
                         + TN * OUT_F * isz)
    s2 = pl.pallas_call(
        _gc1_kernel,
        out_shape=jax.ShapeDtypeStruct((B, N, OUT_F), cd),
        grid_spec=pltpu.PrefetchScalarGridSpec(
            num_scalar_prefetch=0,
            grid=(B, R),
            in_specs=[
                pl.BlockSpec((None, TN, N), lambda b, r: (b, r, 0)),      # adj tile
                pl.BlockSpec((None, N, HID_F), lambda b, r: (b, 0, 0)),   # s1 (resident)
                pl.BlockSpec((HID_F, OUT_F), lambda b, r: (0, 0)),        # W2
                pl.BlockSpec((3, HID_F), lambda b, r: (0, 0)),            # b1/g1/beta1 slab
            ],
            out_specs=pl.BlockSpec((None, TN, OUT_F), lambda b, r: (b, r, 0)),
        ),
        compiler_params=pltpu.CompilerParams(
            dimension_semantics=("parallel", "parallel"),
            vmem_limit_bytes=vmem_a),
    )(adj_c, s1, w2c, p1)

    # ---- Pass B: out = LeakyReLU(LN(adj @ s2 + b2)), row-tiled ----
    vmem_b = _vmem_limit(TN * N * isz + N * OUT_F * isz
                         + 3 * OUT_F * 4 + TN * OUT_F * 4)
    out = pl.pallas_call(
        _gc2_kernel,
        out_shape=jax.ShapeDtypeStruct((B, N, OUT_F), jnp.float32),
        grid_spec=pltpu.PrefetchScalarGridSpec(
            num_scalar_prefetch=0,
            grid=(B, R),
            in_specs=[
                pl.BlockSpec((None, TN, N), lambda b, r: (b, r, 0)),      # adj tile
                pl.BlockSpec((None, N, OUT_F), lambda b, r: (b, 0, 0)),   # s2 (resident)
                pl.BlockSpec((3, OUT_F), lambda b, r: (0, 0)),            # b2/g2/beta2 slab
            ],
            out_specs=pl.BlockSpec((None, TN, OUT_F), lambda b, r: (b, r, 0)),
        ),
        compiler_params=pltpu.CompilerParams(
            dimension_semantics=("parallel", "parallel"),
            vmem_limit_bytes=vmem_b),
    )(adj_c, s2, p2)

    return out


# ---------------------------------------------------------------------------
# Parameter init (mirrors GraphConvolution.reset_parameters + LayerNorm default)
# ---------------------------------------------------------------------------
def init_params(key):
    k1, k2, k3, k4 = jax.random.split(key, 4)
    stdv1 = 1.0 / math.sqrt(HID_F)
    stdv2 = 1.0 / math.sqrt(OUT_F)
    w1 = jax.random.uniform(k1, (IN_F, HID_F), jnp.float32, -stdv1, stdv1)
    b1 = jax.random.uniform(k2, (HID_F,), jnp.float32, -stdv1, stdv1)
    w2 = jax.random.uniform(k3, (HID_F, OUT_F), jnp.float32, -stdv2, stdv2)
    b2 = jax.random.uniform(k4, (OUT_F,), jnp.float32, -stdv2, stdv2)
    g1 = jnp.ones((HID_F,), jnp.float32)
    bt1 = jnp.zeros((HID_F,), jnp.float32)
    g2 = jnp.ones((OUT_F,), jnp.float32)
    bt2 = jnp.zeros((OUT_F,), jnp.float32)
    return (w1, b1, g1, bt1, w2, b2, g2, bt2)


# ---------------------------------------------------------------------------
# Pure-JAX reference (compute_dtype mirrors the kernel's matmul-input casts)
# ---------------------------------------------------------------------------
def gcn_reference(x, adj, params, compute_dtype=jnp.float32):
    w1, b1, g1, bt1, w2, b2, g2, bt2 = params
    cd = compute_dtype

    def ln(h, g, b):
        mu = jnp.mean(h, axis=-1, keepdims=True)
        var = jnp.mean((h - mu) ** 2, axis=-1, keepdims=True)
        return (h - mu) / jnp.sqrt(var + LN_EPS) * g + b

    lrelu = lambda h: jnp.where(h > 0, h, LEAKY_SLOPE * h)

    def mm(a, b):
        eq = '...ij,jk->...ik' if b.ndim == 2 else '...ij,...jk->...ik'
        return jnp.einsum(eq, a.astype(cd), b.astype(cd),
                          preferred_element_type=jnp.float32)

    s1 = mm(x, w1).astype(cd)
    h1 = lrelu(ln(mm(adj, s1) + b1, g1, bt1))
    s2 = mm(h1, w2).astype(cd)
    out = lrelu(ln(mm(adj, s2) + b2, g2, bt2))
    return out


if __name__ == "__main__":
    B, N = 2, 8
    key = jax.random.PRNGKey(0)
    kx, kadj, kp = jax.random.split(key, 3)

    x = jax.random.normal(kx, (B, N, IN_F), jnp.float32)
    adj = jax.random.uniform(kadj, (B, N, N), jnp.float32)
    params = init_params(kp)

    # Strict f32 path: bit-for-bit module semantics, tight tolerance.
    out_f32 = jax.block_until_ready(
        gcn_forward(x, adj, params, compute_dtype=jnp.float32))
    ref_f32 = gcn_reference(x, adj, params, compute_dtype=jnp.float32)
    assert out_f32.shape == (B, N, OUT_F)
    assert jnp.allclose(out_f32, ref_f32, atol=1e-4, rtol=1e-4)

    # Default bf16 fast path: compare against a reference with mirrored casts.
    out_bf16 = jax.block_until_ready(gcn_forward(x, adj, params))
    ref_bf16 = gcn_reference(x, adj, params, compute_dtype=jnp.bfloat16)
    assert out_bf16.shape == (B, N, OUT_F)
    assert jnp.allclose(out_bf16, ref_bf16, atol=2e-2, rtol=2e-2)

    print("KERNEL_OK")
</pallas_src>

<mosaic_0001>
module attributes {stable_mosaic.version = 11 : i64} {
  func.func @_xw_kernel(%arg0: i32, %arg1: memref<16x256xf32, #tpu.memory_space<vmem>>, %arg2: memref<256x64xf32, #tpu.memory_space<vmem>>, %arg3: memref<16x64xf32, #tpu.memory_space<vmem>>) attributes {dimension_semantics = [#tpu.dimension_semantics<parallel>], iteration_bounds = array<i64: 1>, scalar_prefetch = 0 : i64, scratch_operands = 0 : i64, tpu.core_type = #tpu.core_type<tc>, window_params = [{transform_indices = @transform_0, window_bounds = array<i64: 16, 256>}, {pipeline_mode = #tpu.pipeline_mode<synchronous>, transform_indices = @transform_1, window_bounds = array<i64: 256, 64>}, {transform_indices = @transform_2, window_bounds = array<i64: 16, 64>}]} {
    %c0 = arith.constant 0 : index
    %c0_0 = arith.constant 0 : index
    %0 = vector.load %arg1[%c0, %c0_0] : memref<16x256xf32, #tpu.memory_space<vmem>>, vector<16x256xf32>
    %c0_1 = arith.constant 0 : index
    %c0_2 = arith.constant 0 : index
    %1 = vector.load %arg2[%c0_1, %c0_2] : memref<256x64xf32, #tpu.memory_space<vmem>>, vector<256x64xf32>
    %cst = arith.constant dense<0.000000e+00> : vector<16x64xf32>
    %2 = tpu.matmul %0, %1, %cst {dimension_numbers = #tpu.dot_dimension_numbers<[1], [0], [0], [1], [0, 0, 1, 1], [], []>} : vector<16x256xf32>, vector<256x64xf32>, vector<16x64xf32> -> vector<16x64xf32>
    %c0_3 = arith.constant 0 : index
    %c0_4 = arith.constant 0 : index
    %3 = vector.load %arg3[%c0_3, %c0_4] : memref<16x64xf32, #tpu.memory_space<vmem>>, vector<16x64xf32>
    tpu.vector_store %arg3[%c0_3, %c0_4], %2 {strides = array<i32>} : memref<16x64xf32, #tpu.memory_space<vmem>>, vector<16x64xf32>,
    return
  }
  func.func @transform_0(%arg0: i32) -> (i32, i32) {
    %c0_i32 = arith.constant 0 : i32
    %c0_i32_0 = arith.constant 0 : i32
    return %arg0, %c0_i32 : i32, i32
  }
  func.func @transform_1(%arg0: i32) -> (i32, i32) {
    %c0_i32 = arith.constant 0 : i32
    %c0_i32_0 = arith.constant 0 : i32
    %c0_i32_1 = arith.constant 0 : i32
    return %c0_i32, %c0_i32_0 : i32, i32
  }
  func.func @transform_2(%arg0: i32) -> (i32, i32) {
    %c0_i32 = arith.constant 0 : i32
    %c0_i32_0 = arith.constant 0 : i32
    return %arg0, %c0_i32 : i32, i32
  }
}

</mosaic_0001>

<llo_original>
// kernel: tpu_custom_call.1
$region0: #{tpu_custom_call.1}
  #allocation0 [shape = 'u32[]', space=smem, size = 0x4, offset = 0x4, fixed_abs, tag = 'smem constant byte address 0x4 - core index']
  #allocation1 [shape = 'u32[72,128]{1,0:T(1,128)}', space=vmem, size = 0x9000, scoped, tag = 'internal scratch']
  %s0 = inlined_call_operand.vmem [shape: f32[16,256], index: 0, kind: input, shape index: {}]
  %s1 = inlined_call_operand.vmem [shape: f32[256,64], index: 1, kind: input, shape index: {}]
  %s2 = inlined_call_operand.hbm [shape: f32[16,64], index: 2, kind: output, shape index: {}]
  %s3 = sld [smem:[#allocation0]]
  $region18: #{tpu_custom_call.1} parent=0
    _
  %s5 = ssub.s32 1, %s3
  %s6 = scalar_select 0, %s5, %s3
  $region1: #{tpu_custom_call.1} parent=0
    #allocation2 [shape = 'u8[8192]{0}', space=vmem, size = 0x2000, scoped, tag = 'output window, operand 0, single buffered']
    #allocation3 [shape = 's32[1]{0}', space=sflag, size = 0x4, scoped, tag = 'scoped memory for tpu_custom_call.1']
    %7 = vsyncpa [#allocation3], 0
    // Predicated region
    $region2: #{tpu_custom_call.1} parent=1 // pred_check
      _
    $region3: #{tpu_custom_call.1} parent=1 // pred_check_branch
      %9 = sbr.rel (0) target = $region5
    $region4: #{tpu_custom_call.1} parent=1 // pred_region
      _
    $region5: #{tpu_custom_call.1} parent=1 // pred_fallthru
      _
    // Predicated region
    $region6: #{tpu_custom_call.1} parent=1 // pred_check
      _
    $region7: #{tpu_custom_call.1} parent=1 // pred_check_branch
      %11 = sbr.rel (0) target = $region9
    $region8: #{tpu_custom_call.1} parent=1 // pred_region
      _
    $region9: #{tpu_custom_call.1} parent=1 // pred_fallthru
      _
    %v12 = vld [vmem:[%s0] sm:$0xff]
    %v13 = vld [vmem:[%s0 + $0x8] sm:$0xff]
    %v14 = vld [vmem:[%s0 + $0x10] sm:$0xff]
    %v15 = vld [vmem:[%s0 + $0x18] sm:$0xff]
    %v16 = vld [vmem:[%s1] sm:$0xff]
    %v17 = vld [vmem:[%s1 + $0x8] sm:$0xff]
    %v18 = vld [vmem:[%s1 + $0x10] sm:$0xff]
    %v19 = vld [vmem:[%s1 + $0x18] sm:$0xff]
    %v20 = vld [vmem:[%s1 + $0x20] sm:$0xff]
    %v21 = vld [vmem:[%s1 + $0x28] sm:$0xff]
    %v22 = vld [vmem:[%s1 + $0x30] sm:$0xff]
    %v23 = vld [vmem:[%s1 + $0x38] sm:$0xff]
    %v24 = vld [vmem:[%s1 + $0x40] sm:$0xff]
    %v25 = vld [vmem:[%s1 + $0x48] sm:$0xff]
    %v26 = vld [vmem:[%s1 + $0x50] sm:$0xff]
    %v27 = vld [vmem:[%s1 + $0x58] sm:$0xff]
    %v28 = vld [vmem:[%s1 + $0x60] sm:$0xff]
    %v29 = vld [vmem:[%s1 + $0x68] sm:$0xff]
    %v30 = vld [vmem:[%s1 + $0x70] sm:$0xff]
    %v31 = vld [vmem:[%s1 + $0x78] sm:$0xff]
    %v32 = vld [vmem:[%s1 + $0x80] sm:$0xff]
    %v33 = vld [vmem:[%s1 + $0x88] sm:$0xff]
    %v34 = vld [vmem:[%s1 + $0x90] sm:$0xff]
    %v35 = vld [vmem:[%s1 + $0x98] sm:$0xff]
    %v36 = vld [vmem:[%s1 + $0xa0] sm:$0xff]
    %v37 = vld [vmem:[%s1 + $0xa8] sm:$0xff]
    %v38 = vld [vmem:[%s1 + $0xb0] sm:$0xff]
    %v39 = vld [vmem:[%s1 + $0xb8] sm:$0xff]
    %v40 = vld [vmem:[%s1 + $0xc0] sm:$0xff]
    %v41 = vld [vmem:[%s1 + $0xc8] sm:$0xff]
    %v42 = vld [vmem:[%s1 + $0xd0] sm:$0xff]
    %v43 = vld [vmem:[%s1 + $0xd8] sm:$0xff]
    %v44 = vld [vmem:[%s1 + $0xe0] sm:$0xff]
    %v45 = vld [vmem:[%s1 + $0xe8] sm:$0xff]
    %v46 = vld [vmem:[%s1 + $0xf0] sm:$0xff]
    %v47 = vld [vmem:[%s1 + $0xf8] sm:$0xff]
    %48 = vmatpush.msra.mxu0 %v31
    %49 = vmatpush.msra.mxu0 %v30
    %50 = vmatpush.msra.mxu0 %v29
    %51 = vmatpush.msra.mxu0 %v28
    %52 = vmatpush.msra.mxu0 %v27
    %53 = vmatpush.msra.mxu0 %v26
    %54 = vmatpush.msra.mxu0 %v25
    %55 = vmatpush.msra.mxu0 %v24
    %56 = vmatpush.msra.mxu0 %v23
    %57 = vmatpush.msra.mxu0 %v22
    %58 = vmatpush.msra.mxu0 %v21
    %59 = vmatpush.msra.mxu0 %v20
    %60 = vmatpush.msra.mxu0 %v19
    %61 = vmatpush.msra.mxu0 %v18
    %62 = vmatpush.msra.mxu0 %v17
    %63 = vmatpush.msra.mxu0 %v16
    %64 = vmatmul.f32.gmra.mxu0 %v12
    %v65 = vpop.f32.mrf.mxu0
    %v66 = vadd.f32 0.0, %v65
    %67 = vmatmul.f32.gmra.mxu0 %v14
    %v68 = vpop.f32.mrf.mxu0
    %v69 = vadd.f32 0.0, %v68
    %70 = vdwg.mxu0
    %71 = vmatpush.msra.mxu0 %v47
    %72 = vmatpush.msra.mxu0 %v46
    %73 = vmatpush.msra.mxu0 %v45
    %74 = vmatpush.msra.mxu0 %v44
    %75 = vmatpush.msra.mxu0 %v43
    %76 = vmatpush.msra.mxu0 %v42
    %77 = vmatpush.msra.mxu0 %v41
    %78 = vmatpush.msra.mxu0 %v40
    %79 = vmatpush.msra.mxu0 %v39
    %80 = vmatpush.msra.mxu0 %v38
    %81 = vmatpush.msra.mxu0 %v37
    %82 = vmatpush.msra.mxu0 %v36
    %83 = vmatpush.msra.mxu0 %v35
    %84 = vmatpush.msra.mxu0 %v34
    %85 = vmatpush.msra.mxu0 %v33
    %86 = vmatpush.msra.mxu0 %v32
    %87 = vmatmul.f32.gmra.mxu0 %v13
    %v88 = vpop.f32.mrf.mxu0
    %v89 = vadd.f32 %v66, %v88
    %90 = vmatmul.f32.gmra.mxu0 %v15
    %v91 = vpop.f32.mrf.mxu0
    %v92 = vadd.f32 %v69, %v91
    %93 = vdwg.mxu0
    %vm94 = vcmask 523264
    %95 = vst.msk [vmem:[#allocation2] sm:$0xff] %vm94, %v89
    %96 = vst.msk [vmem:[#allocation2 + $0x8] sm:$0xff] %vm94, %v92
    // Predicated region
    $region10: #{tpu_custom_call.1} parent=1 // pred_check
      _
    $region11: #{tpu_custom_call.1} parent=1 // pred_check_branch
      %98 = sbr.rel (0) target = $region13
    $region12: #{tpu_custom_call.1} parent=1 // pred_region
      %100 = vsyncadd [#allocation3], 0
      %s101 = sshll.u32 [#allocation2], 4
      %s102 = int_to_ptr.vmem [resolvable:$true] %s101
      %s103 = sshll.u32 %s2, 4
      %s104 = int_to_ptr.hbm [resolvable:$true] %s103
      %109 = dma.vmem_to_hbm [thread:$0]  %s102, 256, %s104, [#allocation3], 128, 128, 8
    $region13: #{tpu_custom_call.1} parent=1 // pred_fallthru
      _
    // Predicated region
    $region14: #{tpu_custom_call.1} parent=1 // pred_check
      _
    $region15: #{tpu_custom_call.1} parent=1 // pred_check_branch
      %111 = sbr.rel (0) target = $region17
    $region16: #{tpu_custom_call.1} parent=1 // pred_region
      %113 = dma.done [#allocation3], 256
    $region17: #{tpu_custom_call.1} parent=1 // pred_fallthru
      _
    %114 = vsyncpa [#allocation3], 1

</llo_original>
